<compile_context>
chip_gen: v6e
topology: v6e:2x2x1
jax: 0.10.0
libtpu: 0.0.40
codegen_flags: <defaults>
</compile_context>

<pallas_src>
import jax
import jax.numpy as jnp
from jax.experimental import pallas as pl
from jax.experimental.pallas import tpu as pltpu


def aft_full_kernel(x_ref, wq_ref, bq_ref, wkv_ref, bkv_ref, ew_ref,
                    o_ref, ekv_ref):
    bb, n, d = x_ref.shape
    tq = o_ref.shape[1]
    t = pl.program_id(1)

    # ---- Per-batch-tile invariants: fused K|V projection -> [ek*v | ek] slab.
    # Computed only on the first query-time step of each batch tile; the bf16
    # scratch persists across the sequential ("arbitrary") t sweep.
    @pl.when(t == 0)
    def _():
        for b in range(bb):                                    # bb small; unrolled
            xb = x_ref[b].astype(jnp.bfloat16)                 # (n, d)
            kv = jnp.dot(xb, wkv_ref[...],
                         preferred_element_type=jnp.float32)   # (n, 2d) f32 acc
            kv = kv + bkv_ref[...]
            k_b = kv[:, :d]
            v_b = kv[:, d:]
            # Per-(batch, channel) max shift; cancels exactly in num/den.
            ek = jnp.exp(k_b - jnp.max(k_b, axis=0, keepdims=True))   # <= 1
            # Write the two halves straight into the persistent scratch
            # (no concatenate temporary).
            ekv_ref[b, :, :d] = (ek * v_b).astype(ekv_ref.dtype)
            ekv_ref[b, :, d:] = ek.astype(ekv_ref.dtype)

    # ---- Q projection for this query-row tile, sliced from the resident
    # full-sequence block (no duplicate x input, no extra HBM pass).
    row0 = pl.multiple_of(t * tq, tq)
    xq = x_ref[:, pl.ds(row0, tq), :].astype(jnp.bfloat16)     # (bb, tq, d)
    q = jnp.dot(xq.reshape(bb * tq, d), wq_ref[...],
                preferred_element_type=jnp.float32)
    q = (q + bq_ref[...]).reshape(bb, tq, d)
    sig_q = jax.nn.sigmoid(q)                                  # f32

    # ---- Attention aggregation: one bf16 MXU matmul yields num and den.
    ew = ew_ref[...]                                           # (tq, n) bf16
    for b in range(bb):
        agg = jnp.dot(ew, ekv_ref[b],
                      preferred_element_type=jnp.float32)      # (tq, 2d) f32
        num = agg[:, :d]
        den = agg[:, d:]
        # den is a sum of positive exponentials (>= exp(0) term after shift);
        # EUP approximate reciprocal gives ~bf16-level relative error.
        out_b = sig_q[b] * num * pl.reciprocal(den, approx=True)
        o_ref[b] = out_b.astype(o_ref.dtype)


def aft_full(x, wq_t, bq, wk_t, bk, wv_t, bv, pos, *, block_bs=None,
             block_t=None, vmem_limit_bytes=None):
    """AFT_FULL forward.  x: (bs, n, d); Linear weights PRE-TRANSPOSED (in, out);
    pos: (n, n) learnable position biases."""
    bs, n, d = x.shape
    assert pos.shape == (n, n)

    # --- Parameter-only precompute (independent of x): stabilized exp(pos),
    # streamed as bf16 (halves HBM traffic of the largest per-step input).
    pos_f32 = pos.astype(jnp.float32)
    ew = jnp.exp(pos_f32 - jnp.max(pos_f32, axis=-1, keepdims=True))
    ew = ew.astype(jnp.bfloat16)

    # --- bf16 MXU operands (accumulation stays f32 inside the kernel).
    wq_b = wq_t.astype(jnp.bfloat16)                                    # (d, d)
    wkv_b = jnp.concatenate([wk_t, wv_t], axis=1).astype(jnp.bfloat16)  # (d, 2d)
    bq2 = bq.reshape(1, d).astype(jnp.float32)
    bkv = jnp.concatenate(
        [bk.reshape(1, d), bv.reshape(1, d)], axis=1).astype(jnp.float32)

    # --- Generation-aware VMEM budgeting (v7x: 64 MiB/TC; v5e/v6e: 128 MiB).
    try:
        vmem_cap = int(getattr(pltpu.get_tpu_info(), "vmem_capacity_bytes",
                               64 * 1024 * 1024))
    except Exception:
        vmem_cap = 64 * 1024 * 1024
    budget = vmem_cap // 2                     # headroom for compiler scratch

    xbytes = x.dtype.itemsize

    def vmem_need(bb_, tq_):
        x_blk = 2 * bb_ * n * d * xbytes       # full-seq input (double-buffered)
        ekv = bb_ * n * 2 * d * 2              # persistent bf16 scratch
        out_blk = 2 * bb_ * tq_ * d * xbytes   # output tile (double-buffered)
        ew_blk = 2 * tq_ * n * 2               # exp(pos) tile (double-buffered)
        w_blk = 2 * ((d * d + d * 2 * d) * 2 + 6 * d * 4)
        transient = (n * 2 * d + 3 * tq_ * 2 * d + 4 * tq_ * d) * 4
        return x_blk + ekv + out_blk + ew_blk + w_blk + transient

    # Query-time tile: divisor of n, multiple of 8 (sublane); full n if small.
    if block_t is None:
        tq = n
        if n > 512 and n % 8 == 0:
            for cand in range(512, 7, -8):
                if n % cand == 0:
                    tq = cand
                    break
    else:
        tq = block_t
    assert n % tq == 0 and (tq == n or tq % 8 == 0)

    # Batch tile: biggest divisor of bs fitting the VMEM budget; prefer >= 2
    # batch tiles so both cores stay busy (megacore / v7x dual-TC).
    if block_bs is None:
        bb = 1
        caps = (bs // 2, bs) if bs >= 2 else (1,)
        done = False
        for cap in caps:
            for cand in range(max(1, min(bs, cap)), 0, -1):
                if bs % cand == 0 and vmem_need(cand, tq) <= budget:
                    bb = cand
                    done = True
                    break
            if done:
                break
    else:
        bb = block_bs
    assert bs % bb == 0

    if vmem_limit_bytes is None:
        vmem_limit_bytes = min(int(vmem_cap * 0.85), 100 * 1024 * 1024)

    grid = (bs // bb, n // tq)

    # Advisory cost estimate so XLA schedules the custom call sensibly.
    flops = (2 * bs * n * d * d               # Q projection
             + 2 * bs * n * d * (2 * d)       # fused K|V projection
             + 2 * bs * n * n * (2 * d))      # attention aggregation (num+den)
    transcendentals = 2 * bs * n * d          # exp(k) + sigmoid(q)
    bytes_accessed = (bs * n * d * xbytes                     # x (read once)
                      + (bs // bb) * n * n * 2                # exp(pos) stream
                      + (d * d + d * 2 * d) * 2 + 6 * d * 4   # weights/biases
                      + bs * n * d * xbytes)                  # output
    cost = pl.CostEstimate(flops=flops, transcendentals=transcendentals,
                           bytes_accessed=bytes_accessed)

    # TODO(synk): on v7x with bs // bb < 2, split the t axis into
    # (t_outer "parallel", t_inner "arbitrary") so both TensorCores stay busy.
    return pl.pallas_call(
        aft_full_kernel,
        out_shape=jax.ShapeDtypeStruct((bs, n, d), x.dtype),
        grid_spec=pltpu.PrefetchScalarGridSpec(
            num_scalar_prefetch=0,
            grid=grid,
            in_specs=[
                pl.BlockSpec((bb, n, d), lambda b, t: (b, 0, 0)),  # x (resident over t)
                pl.BlockSpec((d, d), lambda b, t: (0, 0)),         # Wq^T     bf16
                pl.BlockSpec((1, d), lambda b, t: (0, 0)),         # bq       f32
                pl.BlockSpec((d, 2 * d), lambda b, t: (0, 0)),     # [Wk|Wv]^T bf16
                pl.BlockSpec((1, 2 * d), lambda b, t: (0, 0)),     # [bk|bv]  f32
                pl.BlockSpec((tq, n), lambda b, t: (t, 0)),        # exp(pos) tile bf16
            ],
            out_specs=pl.BlockSpec((bb, tq, d), lambda b, t: (b, t, 0)),
            scratch_shapes=[pltpu.VMEM((bb, n, 2 * d), jnp.bfloat16)],
        ),
        compiler_params=pltpu.CompilerParams(
            dimension_semantics=("parallel", "arbitrary"),
            vmem_limit_bytes=vmem_limit_bytes,
        ),
        cost_estimate=cost,
    )(x, wq_b, bq2, wkv_b, bkv, ew)


def aft_full_reference(x, wq_t, bq, wk_t, bk, wv_t, bv, pos):
    # Pure-JAX reference mirroring the PyTorch forward.
    q = x @ wq_t + bq
    k = x @ wk_t + bk
    v = x @ wv_t + bv
    # e[b, t, s, c] = exp(k[b, s, c] + pos[t, s])
    e = jnp.exp(k[:, None, :, :] + pos[None, :, :, None])
    num = jnp.sum(e * v[:, None, :, :], axis=2)
    den = jnp.sum(e, axis=2)
    return jax.nn.sigmoid(q) * (num / den)


if __name__ == "__main__":
    def make_inputs(key, bs, n, d, w_std=0.1):
        ks = jax.random.split(key, 5)
        x = jax.random.normal(ks[0], (bs, n, d), dtype=jnp.float32)
        # nn.Linear-style weights (stored pre-transposed: (in, out)), bias 0.
        wq_t = w_std * jax.random.normal(ks[1], (d, d), dtype=jnp.float32)
        wk_t = w_std * jax.random.normal(ks[2], (d, d), dtype=jnp.float32)
        wv_t = w_std * jax.random.normal(ks[3], (d, d), dtype=jnp.float32)
        bq = jnp.zeros((d,), dtype=jnp.float32)
        bk = jnp.zeros((d,), dtype=jnp.float32)
        bv = jnp.zeros((d,), dtype=jnp.float32)
        # position_biases is a learnable parameter (init = ones); perturb so the
        # test actually exercises the exp(pos) aggregation path.
        pos = 1.0 + 0.25 * jax.random.normal(ks[4], (n, n), dtype=jnp.float32)
        return x, wq_t, bq, wk_t, bk, wv_t, bv, pos

    def check(out, ref, tol=3.5e-2, name=""):
        # Tolerance covers bf16 MXU operands + EUP approximate reciprocal.
        err = float(jnp.max(jnp.abs(out - ref)))
        scale = float(jnp.max(jnp.abs(ref))) + 1e-6
        assert err <= tol * scale, f"{name}: max err {err:.3e} vs scale {scale:.3e}"

    # Test 1: module-like small shapes (batch=2, steps=8, d_model=32).
    args1 = make_inputs(jax.random.PRNGKey(0), bs=2, n=8, d=32)
    out1 = jax.block_until_ready(aft_full(*args1))
    assert out1.shape == (2, 8, 32)
    check(out1, aft_full_reference(*args1), name="test1")

    # Test 2: query-time tiling ("arbitrary" t axis, scratch reuse across t)
    # plus a batch-tile boundary (scratch recomputed at t == 0): grid = (2, 4).
    args2 = make_inputs(jax.random.PRNGKey(1), bs=2, n=64, d=128)
    out2 = jax.block_until_ready(aft_full(*args2, block_bs=1, block_t=16))
    check(out2, aft_full_reference(*args2), name="test2")

    # Test 3: auto heuristics with bb > 1 (lane-dense d).
    args3 = make_inputs(jax.random.PRNGKey(2), bs=4, n=128, d=128)
    out3 = jax.block_until_ready(aft_full(*args3))
    check(out3, aft_full_reference(*args3), name="test3")

    print("KERNEL_OK")
</pallas_src>

<mosaic_0001>
module attributes {stable_mosaic.version = 11 : i64} {
  func.func @aft_full_kernel(%arg0: i32, %arg1: i32, %arg2: memref<1x8x32xf32, #tpu.memory_space<vmem>>, %arg3: memref<32x32xbf16, #tpu.memory_space<vmem>>, %arg4: memref<1x32xf32, #tpu.memory_space<vmem>>, %arg5: memref<32x64xbf16, #tpu.memory_space<vmem>>, %arg6: memref<1x64xf32, #tpu.memory_space<vmem>>, %arg7: memref<8x8xbf16, #tpu.memory_space<vmem>>, %arg8: memref<1x8x32xf32, #tpu.memory_space<vmem>>, %arg9: memref<1x8x64xbf16, #tpu.memory_space<vmem>>) attributes {dimension_semantics = [#tpu.dimension_semantics<parallel>, #tpu.dimension_semantics<arbitrary>], iteration_bounds = array<i64: 2, 1>, scalar_prefetch = 0 : i64, scratch_operands = 1 : i64, tpu.core_type = #tpu.core_type<tc>, window_params = [{transform_indices = @transform_0, window_bounds = array<i64: 1, 8, 32>}, {pipeline_mode = #tpu.pipeline_mode<synchronous>, transform_indices = @transform_1, window_bounds = array<i64: 32, 32>}, {pipeline_mode = #tpu.pipeline_mode<synchronous>, transform_indices = @transform_2, window_bounds = array<i64: 1, 32>}, {pipeline_mode = #tpu.pipeline_mode<synchronous>, transform_indices = @transform_3, window_bounds = array<i64: 32, 64>}, {pipeline_mode = #tpu.pipeline_mode<synchronous>, transform_indices = @transform_4, window_bounds = array<i64: 1, 64>}, {transform_indices = @transform_5, window_bounds = array<i64: 8, 8>}, {transform_indices = @transform_6, window_bounds = array<i64: 1, 8, 32>}]} {
    %c0_i32 = arith.constant 0 : i32
    %0 = arith.cmpi eq, %arg1, %c0_i32 : i32
    %1 = arith.extui %0 : i1 to i32
    %c0_i32_0 = arith.constant 0 : i32
    %2 = arith.cmpi ne, %1, %c0_i32_0 : i32
    scf.if %2 {
      %c0_16 = arith.constant 0 : index
      %c0_17 = arith.constant 0 : index
      %c0_18 = arith.constant 0 : index
      %33 = vector.load %arg2[%c0_16, %c0_17, %c0_18] : memref<1x8x32xf32, #tpu.memory_space<vmem>>, vector<1x8x32xf32>
      %34 = vector.shape_cast %33 : vector<1x8x32xf32> to vector<8x32xf32>
      %35 = arith.truncf %34 : vector<8x32xf32> to vector<8x32xbf16>
      %c0_19 = arith.constant 0 : index
      %c0_20 = arith.constant 0 : index
      %36 = vector.load %arg5[%c0_19, %c0_20] : memref<32x64xbf16, #tpu.memory_space<vmem>>, vector<32x64xbf16>
      %cst_21 = arith.constant dense<0.000000e+00> : vector<8x64xf32>
      %37 = tpu.matmul %35, %36, %cst_21 {dimension_numbers = #tpu.dot_dimension_numbers<[1], [0], [0], [1], [0, 0, 1, 1], [], []>} : vector<8x32xbf16>, vector<32x64xbf16>, vector<8x64xf32> -> vector<8x64xf32>
      %c0_22 = arith.constant 0 : index
      %c0_23 = arith.constant 0 : index
      %38 = vector.load %arg6[%c0_22, %c0_23] : memref<1x64xf32, #tpu.memory_space<vmem>>, vector<1x64xf32>
      %39 = vector.broadcast %38 : vector<1x64xf32> to vector<8x64xf32>
      %40 = arith.addf %37, %39 : vector<8x64xf32>
      %41 = vector.extract_strided_slice %40 {offsets = [0, 0], sizes = [8, 32], strides = [1, 1]} : vector<8x64xf32> to vector<8x32xf32>
      %42 = vector.extract_strided_slice %40 {offsets = [0, 32], sizes = [8, 32], strides = [1, 1]} : vector<8x64xf32> to vector<8x32xf32>
      %cst_24 = arith.constant dense<0xFF800000> : vector<32xf32>
      %43 = vector.multi_reduction <maximumf>, %41, %cst_24 [0] : vector<8x32xf32> to vector<32xf32>
      %44 = vector.shape_cast %43 : vector<32xf32> to vector<1x32xf32>
      %45 = vector.broadcast %44 : vector<1x32xf32> to vector<8x32xf32>
      %46 = arith.subf %41, %45 : vector<8x32xf32>
      %47 = math.exp %46 : vector<8x32xf32>
      %48 = arith.mulf %47, %42 : vector<8x32xf32>
      %49 = arith.truncf %48 : vector<8x32xf32> to vector<8x32xbf16>
      %c0_25 = arith.constant 0 : index
      %c0_26 = arith.constant 0 : index
      %c0_27 = arith.constant 0 : index
      %50 = vector.load %arg9[%c0_25, %c0_26, %c0_27] : memref<1x8x64xbf16, #tpu.memory_space<vmem>>, vector<1x8x32xbf16>
      %51 = vector.shape_cast %50 : vector<1x8x32xbf16> to vector<8x32xbf16>
      %52 = vector.shape_cast %49 : vector<8x32xbf16> to vector<1x8x32xbf16>
      tpu.vector_store %arg9[%c0_25, %c0_26, %c0_27], %52 {strides = array<i32>} : memref<1x8x64xbf16, #tpu.memory_space<vmem>>, vector<1x8x32xbf16>,
      %53 = arith.truncf %47 : vector<8x32xf32> to vector<8x32xbf16>
      %c0_28 = arith.constant 0 : index
      %c0_29 = arith.constant 0 : index
      %c32 = arith.constant 32 : index
      %54 = vector.load %arg9[%c0_28, %c0_29, %c32] : memref<1x8x64xbf16, #tpu.memory_space<vmem>>, vector<1x8x32xbf16>
      %55 = vector.shape_cast %54 : vector<1x8x32xbf16> to vector<8x32xbf16>
      %56 = vector.shape_cast %53 : vector<8x32xbf16> to vector<1x8x32xbf16>
      tpu.vector_store %arg9[%c0_28, %c0_29, %c32], %56 {strides = array<i32>} : memref<1x8x64xbf16, #tpu.memory_space<vmem>>, vector<1x8x32xbf16>,
    } else {
    }
    %c8_i32 = arith.constant 8 : i32
    %3 = arith.muli %arg1, %c8_i32 : i32
    %4 = tpu.assume_multiple %3, 8 : i32
    %c0 = arith.constant 0 : index
    %5 = arith.index_cast %4 : i32 to index
    %c0_1 = arith.constant 0 : index
    %6 = vector.load %arg2[%c0, %5, %c0_1] : memref<1x8x32xf32, #tpu.memory_space<vmem>>, vector<1x8x32xf32>
    %7 = arith.truncf %6 : vector<1x8x32xf32> to vector<1x8x32xbf16>
    %8 = vector.shape_cast %7 : vector<1x8x32xbf16> to vector<8x32xbf16>
    %c0_2 = arith.constant 0 : index
    %c0_3 = arith.constant 0 : index
    %9 = vector.load %arg3[%c0_2, %c0_3] : memref<32x32xbf16, #tpu.memory_space<vmem>>, vector<32x32xbf16>
    %cst = arith.constant dense<0.000000e+00> : vector<8x32xf32>
    %10 = tpu.matmul %8, %9, %cst {dimension_numbers = #tpu.dot_dimension_numbers<[1], [0], [0], [1], [0, 0, 1, 1], [], []>} : vector<8x32xbf16>, vector<32x32xbf16>, vector<8x32xf32> -> vector<8x32xf32>
    %c0_4 = arith.constant 0 : index
    %c0_5 = arith.constant 0 : index
    %11 = vector.load %arg4[%c0_4, %c0_5] : memref<1x32xf32, #tpu.memory_space<vmem>>, vector<1x32xf32>
    %12 = vector.broadcast %11 : vector<1x32xf32> to vector<8x32xf32>
    %13 = arith.addf %10, %12 : vector<8x32xf32>
    %14 = vector.shape_cast %13 : vector<8x32xf32> to vector<1x8x32xf32>
    %15 = arith.negf %14 : vector<1x8x32xf32>
    %16 = math.exp %15 : vector<1x8x32xf32>
    %cst_6 = arith.constant 1.000000e+00 : f32
    %17 = vector.broadcast %cst_6 : f32 to vector<1x8x32xf32>
    %18 = arith.addf %17, %16 : vector<1x8x32xf32>
    %19 = arith.divf %17, %18 : vector<1x8x32xf32>
    %c0_7 = arith.constant 0 : index
    %c0_8 = arith.constant 0 : index
    %20 = vector.load %arg7[%c0_7, %c0_8] : memref<8x8xbf16, #tpu.memory_space<vmem>>, vector<8x8xbf16>
    %c0_9 = arith.constant 0 : index
    %c0_10 = arith.constant 0 : index
    %c0_11 = arith.constant 0 : index
    %21 = vector.load %arg9[%c0_9, %c0_10, %c0_11] : memref<1x8x64xbf16, #tpu.memory_space<vmem>>, vector<1x8x64xbf16>
    %22 = vector.shape_cast %21 : vector<1x8x64xbf16> to vector<8x64xbf16>
    %cst_12 = arith.constant dense<0.000000e+00> : vector<8x64xf32>
    %23 = tpu.matmul %20, %22, %cst_12 {dimension_numbers = #tpu.dot_dimension_numbers<[1], [0], [0], [1], [0, 0, 1, 1], [], []>} : vector<8x8xbf16>, vector<8x64xbf16>, vector<8x64xf32> -> vector<8x64xf32>
    %24 = vector.extract_strided_slice %23 {offsets = [0, 0], sizes = [8, 32], strides = [1, 1]} : vector<8x64xf32> to vector<8x32xf32>
    %25 = vector.extract_strided_slice %23 {offsets = [0, 32], sizes = [8, 32], strides = [1, 1]} : vector<8x64xf32> to vector<8x32xf32>
    %26 = vector.shape_cast %19 : vector<1x8x32xf32> to vector<8x32xf32>
    %27 = arith.mulf %26, %24 : vector<8x32xf32>
    %28 = tpu.reciprocal %25 {approx = true} : vector<8x32xf32> -> vector<8x32xf32>
    %29 = arith.mulf %27, %28 : vector<8x32xf32>
    %c0_13 = arith.constant 0 : index
    %c0_14 = arith.constant 0 : index
    %c0_15 = arith.constant 0 : index
    %30 = vector.load %arg8[%c0_13, %c0_14, %c0_15] : memref<1x8x32xf32, #tpu.memory_space<vmem>>, vector<1x8x32xf32>
    %31 = vector.shape_cast %30 : vector<1x8x32xf32> to vector<8x32xf32>
    %32 = vector.shape_cast %29 : vector<8x32xf32> to vector<1x8x32xf32>
    tpu.vector_store %arg8[%c0_13, %c0_14, %c0_15], %32 {strides = array<i32>} : memref<1x8x32xf32, #tpu.memory_space<vmem>>, vector<1x8x32xf32>,
    return
  }
  func.func @transform_0(%arg0: i32, %arg1: i32) -> (i32, i32, i32) {
    %c0_i32 = arith.constant 0 : i32
    %c0_i32_0 = arith.constant 0 : i32
    %c0_i32_1 = arith.constant 0 : i32
    return %arg0, %c0_i32, %c0_i32_0 : i32, i32, i32
  }
  func.func @transform_1(%arg0: i32, %arg1: i32) -> (i32, i32) {
    %c0_i32 = arith.constant 0 : i32
    %c0_i32_0 = arith.constant 0 : i32
    %c0_i32_1 = arith.constant 0 : i32
    return %c0_i32, %c0_i32_0 : i32, i32
  }
  func.func @transform_2(%arg0: i32, %arg1: i32) -> (i32, i32) {
    %c0_i32 = arith.constant 0 : i32
    %c0_i32_0 = arith.constant 0 : i32
    %c0_i32_1 = arith.constant 0 : i32
    return %c0_i32, %c0_i32_0 : i32, i32
  }
  func.func @transform_3(%arg0: i32, %arg1: i32) -> (i32, i32) {
    %c0_i32 = arith.constant 0 : i32
    %c0_i32_0 = arith.constant 0 : i32
    %c0_i32_1 = arith.constant 0 : i32
    return %c0_i32, %c0_i32_0 : i32, i32
  }
  func.func @transform_4(%arg0: i32, %arg1: i32) -> (i32, i32) {
    %c0_i32 = arith.constant 0 : i32
    %c0_i32_0 = arith.constant 0 : i32
    %c0_i32_1 = arith.constant 0 : i32
    return %c0_i32, %c0_i32_0 : i32, i32
  }
  func.func @transform_5(%arg0: i32, %arg1: i32) -> (i32, i32) {
    %c0_i32 = arith.constant 0 : i32
    %c0_i32_0 = arith.constant 0 : i32
    return %arg1, %c0_i32 : i32, i32
  }
  func.func @transform_6(%arg0: i32, %arg1: i32) -> (i32, i32, i32) {
    %c0_i32 = arith.constant 0 : i32
    %c0_i32_0 = arith.constant 0 : i32
    return %arg0, %arg1, %c0_i32 : i32, i32, i32
  }
}

</mosaic_0001>

<llo_original>
// kernel: tpu_custom_call.1
$region0: #{tpu_custom_call.1}
  #allocation0 [shape = 'u32[]', space=smem, size = 0x4, offset = 0x4, fixed_abs, tag = 'smem constant byte address 0x4 - core index']
  #allocation1 [shape = 'u32[144,128]{1,0:T(1,128)}', space=vmem, size = 0x12000, scoped, tag = 'internal scratch']
  #allocation2 [shape = 'bf16[1,8,64]{2,1,0:T(8,128)(2,1)}', space=vmem, size = 0x800, scoped, tag = 'scratch operand']
  %s0 = inlined_call_operand.hbm [shape: f32[2,8,32], index: 0, kind: input, shape index: {}]
  %s1 = inlined_call_operand.hbm [shape: bf16[32,32], index: 1, kind: input, shape index: {}]
  %s2 = inlined_call_operand.vmem [shape: f32[1,32], index: 2, kind: input, shape index: {}]
  %s3 = inlined_call_operand.hbm [shape: bf16[32,64], index: 3, kind: input, shape index: {}]
  %s4 = inlined_call_operand.vmem [shape: f32[1,64], index: 4, kind: input, shape index: {}]
  %s5 = inlined_call_operand.vmem [shape: bf16[8,8], index: 5, kind: input, shape index: {}]
  %s6 = inlined_call_operand.hbm [shape: f32[2,8,32], index: 6, kind: output, shape index: {}]
  %s7 = sld [smem:[#allocation0]]
  $region73: #{tpu_custom_call.1} parent=0
    _
  %s9 = ssub.s32 1, %s7
  %s10 = scalar_select 0, %s9, %s7
  $region1: #{tpu_custom_call.1} parent=0
    #allocation3 [shape = 'u8[8192]{0}', space=vmem, size = 0x2000, scoped, tag = 'input window, operand 0']
    #allocation4 [shape = 's32[2]{0}', space=sflag, size = 0x8, scoped, tag = 'scoped memory for tpu_custom_call.1']
    #allocation5 [shape = 's32[2]{0}', space=sflag, size = 0x8, scoped, tag = 'scoped memory for tpu_custom_call.1']
    #allocation6 [shape = 'u8[8192]{0}', space=vmem, size = 0x2000, scoped, tag = 'input window, operand 1, single buffered']
    #allocation7 [shape = 's32[1]{0}', space=sflag, size = 0x4, scoped, tag = 'scoped memory for tpu_custom_call.1']
    #allocation8 [shape = 'u8[8192]{0}', space=vmem, size = 0x2000, scoped, tag = 'input window, operand 3, single buffered']
    #allocation9 [shape = 'u8[8192]{0}', space=vmem, size = 0x2000, scoped, tag = 'output window, operand 0']
    %11 = vsyncpa [#allocation4], 0
    %s12 = scalar_lea.sflag [#allocation4], 1
    %13 = vsyncpa %s12, 0
    %14 = vsyncpa [#allocation7], 0
    %15 = vsyncpa [#allocation5], 0
    %s16 = scalar_lea.sflag [#allocation5], 1
    %17 = vsyncpa %s16, 0
    loop: start=0, step=1, limit=4
    $region2: #{tpu_custom_call.1} parent=1 // loop_pre_header
      _
    $region3: #{tpu_custom_call.1} parent=1 // loop_header
      %s19 = sphi 0, %s23
      %p20 = scmp.ge.s32.totalorder %s19, 4
      %s26 = sphi 0, %s38
      %s27 = sphi 0, %s34
      %s28 = sphi 0, %s26
      %s29 = sphi 0, %s27
      %s30 = sphi 0, %s28
      %s31 = sphi 0, %s29
      %s41 = sphi 0, %s43
      %s44 = sphi 0, %s41
      %s45 = sphi 0, %s44
      %s61 = sphi 0, %s45
      %s65 = sphi 0, %s65
      %s67 = sphi 0, %s65
      %s68 = sphi 0, %s67
      %s82 = sphi 0, %s68
      %s86 = sphi 0, %s86
      %s88 = sphi 0, %s86
      %s89 = sphi 0, %s88
      %s103 = sphi 0, %s89
      %s107 = sphi 0, %s107
      %s109 = sphi 0, %s107
      %s110 = sphi 0, %s109
      %s124 = sphi 0, %s110
      %s128 = sphi 0, %s128
      %s130 = sphi 0, %s128
      %s131 = sphi 0, %s130
      %s145 = sphi 0, %s131
      %s151 = sphi 0, %s153
      %s154 = sphi 0, %s151
      %s155 = sphi 0, %s154
      %s171 = sphi 0, %s155
      %s179 = sphi 0, %s181
      %s182 = sphi 0, %s179
      %s183 = sphi 0, %s182
      %s199 = sphi 0, %s183
    $region4: #{tpu_custom_call.1} parent=1 // loop_header_branch
      %22 = sbr.rel (%p20) target = $region8
    $region5: #{tpu_custom_call.1} parent=1 // loop_body
      %s24 = ssub.s32 %s19, 1
      %s25 = ssub.s32 %s19, 2
      %s32 = sadd.s32 1, %s27
      %p33 = scmp.ge.s32.totalorder %s32, 1
      %s34 = scalar_select %p33, 0, %s32
      %s35 = sadd.s32 1, %s26
      %s36 = scalar_select %p33, %s35, %s26
      %p37 = scmp.ge.s32.totalorder %s36, 2
      %s38 = scalar_select %p37, 0, %s36
      %s39 = ssub.s32 %s26, %s38
      %p40 = scmp.eq.s32.totalorder %s39, 0
      %s42 = sadd.s32 %s41, 1
      %s43 = scalar_select %p40, %s41, %s42
      %p46 = pneg %p40
      %p47 = scmp.eq.s32.totalorder %s19, 1
      %p48 = por %p46, %p47
      %p49 = scmp.ne.s32.totalorder %s41, %s44
      %p50 = scmp.eq.s32.totalorder %s19, 0
      %p51 = por %p49, %p50
      %p52 = scmp.ne.s32.totalorder %s41, %s44
      %p53 = scmp.eq.s32.totalorder %s24, 1
      %p54 = por %p52, %p53
      %p55 = scmp.ne.s32.totalorder %s44, %s45
      %p56 = scmp.eq.s32.totalorder %s24, 0
      %p57 = por %p55, %p56
      %p58 = scmp.ne.s32.totalorder %s44, %s45
      %p59 = scmp.eq.s32.totalorder %s25, 1
      %p60 = por %p58, %p59
      %p62 = scmp.ne.s32.totalorder %s45, %s61
      %p63 = scmp.eq.s32.totalorder %s25, 0
      %p64 = por %p62, %p63
      %s66 = sadd.s32 %s65, 1
      %p69 = scmp.eq.s32.totalorder %s19, 1
      %p70 = scmp.ne.s32.totalorder %s65, %s67
      %p71 = scmp.eq.s32.totalorder %s19, 0
      %p72 = por %p70, %p71
      %p73 = scmp.ne.s32.totalorder %s65, %s67
      %p74 = scmp.eq.s32.totalorder %s24, 1
      %p75 = por %p73, %p74
      %p76 = scmp.ne.s32.totalorder %s67, %s68
      %p77 = scmp.eq.s32.totalorder %s24, 0
      %p78 = por %p76, %p77
      %p79 = scmp.ne.s32.totalorder %s67, %s68
      %p80 = scmp.eq.s32.totalorder %s25, 1
      %p81 = por %p79, %p80
      %p83 = scmp.ne.s32.totalorder %s68, %s82
      %p84 = scmp.eq.s32.totalorder %s25, 0
      %p85 = por %p83, %p84
      %s87 = sadd.s32 %s86, 1
      %p90 = scmp.eq.s32.totalorder %s19, 1
      %p91 = scmp.ne.s32.totalorder %s86, %s88
      %p92 = scmp.eq.s32.totalorder %s19, 0
      %p93 = por %p91, %p92
      %p94 = scmp.ne.s32.totalorder %s86, %s88
      %p95 = scmp.eq.s32.totalorder %s24, 1
      %p96 = por %p94, %p95
      %p97 = scmp.ne.s32.totalorder %s88, %s89
      %p98 = scmp.eq.s32.totalorder %s24, 0
      %p99 = por %p97, %p98
      %p100 = scmp.ne.s32.totalorder %s88, %s89
      %p101 = scmp.eq.s32.totalorder %s25, 1
      %p102 = por %p100, %p101
      %p104 = scmp.ne.s32.totalorder %s89, %s103
      %p105 = scmp.eq.s32.totalorder %s25, 0
      %p106 = por %p104, %p105
      %s108 = sadd.s32 %s107, 1
      %p111 = scmp.eq.s32.totalorder %s19, 1
      %p112 = scmp.ne.s32.totalorder %s107, %s109
      %p113 = scmp.eq.s32.totalorder %s19, 0
      %p114 = por %p112, %p113
      %p115 = scmp.ne.s32.totalorder %s107, %s109
      %p116 = scmp.eq.s32.totalorder %s24, 1
      %p117 = por %p115, %p116
      %p118 = scmp.ne.s32.totalorder %s109, %s110
      %p119 = scmp.eq.s32.totalorder %s24, 0
      %p120 = por %p118, %p119
      %p121 = scmp.ne.s32.totalorder %s109, %s110
      %p122 = scmp.eq.s32.totalorder %s25, 1
      %p123 = por %p121, %p122
      %p125 = scmp.ne.s32.totalorder %s110, %s124
      %p126 = scmp.eq.s32.totalorder %s25, 0
      %p127 = por %p125, %p126
      %s129 = sadd.s32 %s128, 1
      %p132 = scmp.eq.s32.totalorder %s19, 1
      %p133 = scmp.ne.s32.totalorder %s128, %s130
      %p134 = scmp.eq.s32.totalorder %s19, 0
      %p135 = por %p133, %p134
      %p136 = scmp.ne.s32.totalorder %s128, %s130
      %p137 = scmp.eq.s32.totalorder %s24, 1
      %p138 = por %p136, %p137
      %p139 = scmp.ne.s32.totalorder %s130, %s131
      %p140 = scmp.eq.s32.totalorder %s24, 0
      %p141 = por %p139, %p140
      %p142 = scmp.ne.s32.totalorder %s130, %s131
      %p143 = scmp.eq.s32.totalorder %s25, 1
      %p144 = por %p142, %p143
      %p146 = scmp.ne.s32.totalorder %s131, %s145
      %p147 = scmp.eq.s32.totalorder %s25, 0
      %p148 = por %p146, %p147
      %s149 = ssub.s32 %s27, %s34
      %p150 = scmp.eq.s32.totalorder %s149, 0
      %s152 = sadd.s32 %s151, 1
      %s153 = scalar_select %p150, %s151, %s152
      %p156 = pneg %p150
      %p157 = scmp.eq.s32.totalorder %s19, 1
      %p158 = por %p156, %p157
      %p159 = scmp.ne.s32.totalorder %s151, %s154
      %p160 = scmp.eq.s32.totalorder %s19, 0
      %p161 = por %p159, %p160
      %p162 = scmp.ne.s32.totalorder %s151, %s154
      %p163 = scmp.eq.s32.totalorder %s24, 1
      %p164 = por %p162, %p163
      %p165 = scmp.ne.s32.totalorder %s154, %s155
      %p166 = scmp.eq.s32.totalorder %s24, 0
      %p167 = por %p165, %p166
      %p168 = scmp.ne.s32.totalorder %s154, %s155
      %p169 = scmp.eq.s32.totalorder %s25, 1
      %p170 = por %p168, %p169
      %p172 = scmp.ne.s32.totalorder %s155, %s171
      %p173 = scmp.eq.s32.totalorder %s25, 0
      %p174 = por %p172, %p173
      %s175 = ssub.s32 %s26, %s38
      %s176 = ssub.s32 %s27, %s34
      %s177 = sor.u32 %s175, %s176
      %p178 = scmp.eq.s32.totalorder %s177, 0
      %s180 = sadd.s32 %s179, 1
      %s181 = scalar_select %p178, %s179, %s180
      %p184 = pneg %p178
      %p185 = scmp.eq.s32.totalorder %s19, 1
      %p186 = por %p184, %p185
      %p187 = scmp.ne.s32.totalorder %s179, %s182
      %p188 = scmp.eq.s32.totalorder %s19, 0
      %p189 = por %p187, %p188
      %p190 = scmp.ne.s32.totalorder %s179, %s182
      %p191 = scmp.eq.s32.totalorder %s24, 1
      %p192 = por %p190, %p191
      %p193 = scmp.ne.s32.totalorder %s182, %s183
      %p194 = scmp.eq.s32.totalorder %s24, 0
      %p195 = por %p193, %p194
      %p196 = scmp.ne.s32.totalorder %s182, %s183
      %p197 = scmp.eq.s32.totalorder %s25, 1
      %p198 = por %p196, %p197
      %p200 = scmp.ne.s32.totalorder %s183, %s199
      %p201 = scmp.eq.s32.totalorder %s25, 0
      %p202 = por %p200, %p201
      %p203 = scmp.le.s32.totalorder 1, %s19
      %p204 = scmp.lt.s32.totalorder %s19, 3
      %p205 = pnand %p203, %p204
      %p206 = pneg %p205
      // Predicated region
      $region9: #{tpu_custom_call.1} parent=5 // pred_check
        _
      $region10: #{tpu_custom_call.1} parent=5 // pred_check_branch
        %208 = sbr.rel (%p205) target = $region12
      $region11: #{tpu_custom_call.1} parent=5 // pred_region
        %s209 = ssub.s32 %s19, 1
        // Predicated region
        $region13: #{tpu_custom_call.1} parent=11 // pred_check
          %p210 = pneg %p78
        $region14: #{tpu_custom_call.1} parent=11 // pred_check_branch
          %212 = sbr.rel (%p210) target = $region16
        $region15: #{tpu_custom_call.1} parent=11 // pred_region
          %s214 = ssub.s32 256, 256
          %215 = vsyncadd [#allocation7], %s214
          %s216 = sshll.u32 [#allocation6], 4
          %s217 = int_to_ptr.vmem [resolvable:$true] %s216
          %222 = dma.hbm_to_vmem [thread:$0]  %s1, 256, %s217, [#allocation7], 64, 64, 4
        $region16: #{tpu_custom_call.1} parent=11 // pred_fallthru
          _
        // Predicated region
        $region17: #{tpu_custom_call.1} parent=11 // pred_check
          %p223 = pneg %p99
        $region18: #{tpu_custom_call.1} parent=11 // pred_check_branch
          %225 = sbr.rel (%p223) target = $region20
        $region19: #{tpu_custom_call.1} parent=11 // pred_region
          _
        $region20: #{tpu_custom_call.1} parent=11 // pred_fallthru
          _
        // Predicated region
        $region21: #{tpu_custom_call.1} parent=11 // pred_check
          %p226 = pneg %p120
        $region22: #{tpu_custom_call.1} parent=11 // pred_check_branch
          %228 = sbr.rel (%p226) target = $region24
        $region23: #{tpu_custom_call.1} parent=11 // pred_region
          %s230 = ssub.s32 256, 256
          %231 = vsyncadd [#allocation7], %s230
          %s232 = sshll.u32 [#allocation8], 4
          %s233 = int_to_ptr.vmem [resolvable:$true] %s232
          %238 = dma.hbm_to_vmem [thread:$0]  %s3, 256, %s233, [#allocation7], 64, 64, 4
        $region24: #{tpu_custom_call.1} parent=11 // pred_fallthru
          _
        // Predicated region
        $region25: #{tpu_custom_call.1} parent=11 // pred_check
          %p239 = pneg %p141
        $region26: #{tpu_custom_call.1} parent=11 // pred_check_branch
          %241 = sbr.rel (%p239) target = $region28
        $region27: #{tpu_custom_call.1} parent=11 // pred_region
          _
        $region28: #{tpu_custom_call.1} parent=11 // pred_fallthru
          _
        // Predicated region
        $region29: #{tpu_custom_call.1} parent=11 // pred_check
          %p242 = pneg %p167
        $region30: #{tpu_custom_call.1} parent=11 // pred_check_branch
          %244 = sbr.rel (%p242) target = $region32
        $region31: #{tpu_custom_call.1} parent=11 // pred_region
          %p245 = scmp.lt.s32.totalorder %s29, 0
          %s246 = scalar_select %p245, %s29, 0
          %s247 = smul.addr %s246, 4
          %s248 = scalar_lea.vmem %s5, %s247
        $region32: #{tpu_custom_call.1} parent=11 // pred_fallthru
          _
      $region12: #{tpu_custom_call.1} parent=5 // pred_fallthru
        _
      %p249 = scmp.lt.s32.totalorder %s19, 2
      // Predicated region
      $region33: #{tpu_custom_call.1} parent=5 // pred_check
        %p250 = pneg %p249
      $region34: #{tpu_custom_call.1} parent=5 // pred_check_branch
        %252 = sbr.rel (%p250) target = $region36
      $region35: #{tpu_custom_call.1} parent=5 // pred_region
        // Predicated region
        $region37: #{tpu_custom_call.1} parent=35 // pred_check
          %p253 = pneg %p51
        $region38: #{tpu_custom_call.1} parent=35 // pred_check_branch
          %255 = sbr.rel (%p253) target = $region40
        $region39: #{tpu_custom_call.1} parent=35 // pred_region
          %s256 = sand.u32 %s41, 1
          %s257 = scalar_lea.sflag [#allocation4], %s256
          %s258 = sand.u32 %s41, 1
          %s259 = smul.addr %s258, 8
          %s260 = scalar_lea.vmem [#allocation3], %s259
          %s262 = ssub.s32 128, 128
          %263 = vsyncadd %s257, %s262
          %s264 = smul.addr %s26, 128
          %s265 = scalar_lea.hbm %s0, %s264
          %s267 = sshll.u32 %s260, 4
          %s268 = int_to_ptr.vmem [resolvable:$true] %s267
          %270 = dma.hbm_to_vmem [thread:$0]  %s265, 128, %s268, %s257
        $region40: #{tpu_custom_call.1} parent=35 // pred_fallthru
          _
      $region36: #{tpu_custom_call.1} parent=5 // pred_fallthru
        _
      %p271 = scmp.le.s32.totalorder 1, %s19
      %p272 = scmp.lt.s32.totalorder %s19, 3
      %p273 = pnand %p271, %p272
      %p274 = pneg %p273
      // Predicated region
      $region41: #{tpu_custom_call.1} parent=5 // pred_check
        _
      $region42: #{tpu_custom_call.1} parent=5 // pred_check_branch
        %276 = sbr.rel (%p273) target = $region44
      $region43: #{tpu_custom_call.1} parent=5 // pred_region
        %s277 = ssub.s32 %s19, 1
        %s278 = sand.u32 %s44, 1
        %s279 = scalar_lea.sflag [#allocation4], %s278
        %s280 = sand.u32 %s44, 1
        %s281 = smul.addr %s280, 8
        %s282 = scalar_lea.vmem [#allocation3], %s281
        // Predicated region
        $region45: #{tpu_custom_call.1} parent=43 // pred_check
          %p283 = pneg %p57
        $region46: #{tpu_custom_call.1} parent=43 // pred_check_branch
          %285 = sbr.rel (%p283) target = $region48
        $region47: #{tpu_custom_call.1} parent=43 // pred_region
          %286 = dma.done %s279, 128
        $region48: #{tpu_custom_call.1} parent=43 // pred_fallthru
          _
        // Predicated region
        $region49: #{tpu_custom_call.1} parent=43 // pred_check
          %p287 = pneg %p78
        $region50: #{tpu_custom_call.1} parent=43 // pred_check_branch
          %289 = sbr.rel (%p287) target = $region52
        $region51: #{tpu_custom_call.1} parent=43 // pred_region
          %290 = dma.done [#allocation7], 256
        $region52: #{tpu_custom_call.1} parent=43 // pred_fallthru
          _
        // Predicated region
        $region53: #{tpu_custom_call.1} parent=43 // pred_check
          %p291 = pneg %p120
        $region54: #{tpu_custom_call.1} parent=43 // pred_check_branch
          %293 = sbr.rel (%p291) target = $region56
        $region55: #{tpu_custom_call.1} parent=43 // pred_region
          %294 = dma.done [#allocation7], 256
        $region56: #{tpu_custom_call.1} parent=43 // pred_fallthru
          _
        %s295 = sand.u32 %s44, 1
        %s296 = scalar_lea.sflag [#allocation4], %s295
        %s297 = sand.u32 %s44, 1
        %s298 = smul.addr %s297, 8
        %s299 = scalar_lea.vmem [#allocation3], %s298
        %p300 = pneg %p57
        %p301 = pneg %p54
        %p302 = pneg %p78
        %p303 = pneg %p75
        %p304 = pneg %p99
        %p305 = pneg %p96
        %p306 = pneg %p120
        %p307 = pneg %p117
        %p308 = pneg %p141
        %p309 = pneg %p138
        %p310 = scmp.lt.s32.totalorder %s29, 0
        %s311 = scalar_select %p310, %s29, 0
        %s312 = smul.addr %s311, 4
        %s313 = scalar_lea.vmem %s5, %s312
        %p314 = pneg %p167
        %p315 = pneg %p164
        %p316 = pneg %p195
        %p317 = pneg %p192
        %s318 = sand.u32 %s182, 1
        %s319 = scalar_lea.sflag [#allocation5], %s318
        %s320 = sand.u32 %s182, 1
        %s321 = smul.addr %s320, 8
        %s322 = scalar_lea.vmem [#allocation9], %s321
        %p323 = scmp.lt.s32.totalorder %s29, 0
        %s324 = scalar_select %p323, %s29, 0
        %s325 = smul.addr %s324, 4
        %s326 = scalar_lea.vmem %s5, %s325
        %p328 = scmp.eq.s32.totalorder %s29, 0
        // Predicated region
        $region57: #{tpu_custom_call.1} parent=43 // pred_check
          %p329 = pneg %p328
        $region58: #{tpu_custom_call.1} parent=43 // pred_check_branch
          %331 = sbr.rel (%p329) target = $region60
        $region59: #{tpu_custom_call.1} parent=43 // pred_region
          %v332 = vld [vmem:[%s282] sm:$0xff]
          %v333 = vpack.c.bf16 %v332, %v332
          %v334 = vld [vmem:[#allocation8] sm:$0xf]
          %v335 = vld [vmem:[#allocation8 + $0x4] sm:$0xf]
          %v336 = vld [vmem:[#allocation8 + $0x8] sm:$0xf]
          %v337 = vld [vmem:[#allocation8 + $0xc] sm:$0xf]
          %v338 = vld [vmem:[%s4] sm:$0x1]
          %v340 = vlaneseq
          %v341 = vshrl.u32 %v340, 7
          %v342 = vsub.s32 0, %v341
          %v343 = vrot.slane %v338, %v342
          %v349 = vunpack.c.l.b16 %v334
          %v350 = vunpack.c.l.b16 %v335
          %v351 = vunpack.c.l.b16 %v336
          %v352 = vunpack.c.l.b16 %v337
          %v353 = vpack.c.b16 %v350, %v349
          %v354 = vpack.c.b16 %v352, %v351
          %vm357 = vcmask 261120
          %v359 = vsel %vm357, %v333, 0
          %361 = vmatprep.subr.bf16.mxu0 0
          %362 = vmatpush1.bf16.msra.mxu0 0
          %363 = vmatprep.subr.bf16.mxu0 0
          %364 = vmatpush1.bf16.msra.mxu0 0
          %365 = vmatprep.subr.bf16.mxu0 0
          %366 = vmatpush1.bf16.msra.mxu0 0
          %367 = vmatprep.subr.bf16.mxu0 0
          %368 = vmatpush1.bf16.msra.mxu0 0
          %369 = vmatprep.subr.bf16.mxu0 0
          %370 = vmatpush1.bf16.msra.mxu0 0
          %371 = vmatprep.subr.bf16.mxu0 0
          %372 = vmatpush1.bf16.msra.mxu0 0
          %373 = vmatprep.subr.bf16.mxu0 0
          %374 = vmatpush1.bf16.msra.mxu0 %v354
          %375 = vmatprep.subr.bf16.mxu0 0
          %376 = vmatpush1.bf16.msra.mxu0 %v353
          %377 = vmatprep.subr.bf16.mxu0 0
          %378 = vmatpush2.bf16.msra.mxu0 0
          %379 = vmatprep.subr.bf16.mxu0 0
          %380 = vmatpush2.bf16.msra.mxu0 0
          %381 = vmatprep.subr.bf16.mxu0 0
          %382 = vmatpush2.bf16.msra.mxu0 0
          %383 = vmatprep.subr.bf16.mxu0 0
          %384 = vmatpush2.bf16.msra.mxu0 0
          %385 = vmatprep.subr.bf16.mxu0 0
          %386 = vmatpush2.bf16.msra.mxu0 0
          %387 = vmatprep.subr.bf16.mxu0 0
          %388 = vmatpush2.bf16.msra.mxu0 0
          %389 = vmatprep.subr.bf16.mxu0 0
          %390 = vmatpush2.bf16.msra.mxu0 0
          %391 = vmatprep.subr.bf16.mxu0 0
          %392 = vmatpush2.bf16.msra.mxu0 0
          %393 = vmatprep.mubr.bf16.mxu0 0
          %394 = vmatmul.mubr.bf16.gmra.mxu0 %v359
          %v395 = vpop.f32.mrf.mxu0
          %v396 = vadd.f32 %v343, %v395
          %v397 = vpop.f32.mrf.mxu0
          %v398 = vpop.f32.mrf.mxu0
          %v399 = vpop.f32.mrf.mxu0
          %400 = vdwg.mxu0
          %v401 = vsel %vm357, %v396, -inf
          %v402 = vrot.slane %v401, 4
          %v403 = vmax.f32 %v401, %v402
          %v404 = vrot.slane %v403, 2
          %v405 = vmax.f32 %v403, %v404
          %v406 = vrot.slane %v405, 1
          %v407 = vmax.f32 %v405, %v406
          %v408 = vsub.f32 %v396, %v407
          %v409 = vmul.f32 %v408, 1.442695
          %v410 = vpow.pop %v409
          %412 = vrot.lane.b32.xlu0 %v396, 96
          %v413 = vpop.permute.xlu0 %412
          %v415 = vmul.f32 %v410, %v413
          %v416 = vpack.c.bf16 %v415, %v415
          %vm417 = vcmask 257024
          %418 = vst.msk [vmem:[#allocation2] sm:$0xf] %vm417, %v416
          %v419 = vpack.c.bf16 %v410, %v410
          %v421 = vunpack.c.l.b16 %v419
          %v422 = vpack.c.b16 %v421, %v421
          %423 = vrot.lane.b32.xlu0 %v422, 32
          %v424 = vpop.permute.xlu0 %423
          %vm426 = vcmask 519424
          %427 = vst.msk [vmem:[#allocation2] sm:$0xf] %vm426, %v424
        $region60: #{tpu_custom_call.1} parent=43 // pred_fallthru
          _
        %s428 = smul.u32 %s29, 8
        %s429 = scalar_lea.vmem %s282, %s428 [#allocation3]
        %v430 = vld [vmem:[%s429] sm:$0xff]
        %v431 = vpack.c.bf16 %v430, %v430
        %v432 = vld [vmem:[#allocation6] sm:$0xf]
        %v433 = vld [vmem:[#allocation6 + $0x4] sm:$0xf]
        %v434 = vld [vmem:[#allocation6 + $0x8] sm:$0xf]
        %v435 = vld [vmem:[#allocation6 + $0xc] sm:$0xf]
        %v436 = vld [vmem:[%s2] sm:$0x1]
        %v438 = vlaneseq
        %v439 = vshrl.u32 %v438, 7
        %v440 = vsub.s32 0, %v439
        %v441 = vrot.slane %v436, %v440
        %v447 = vunpack.c.l.b16 %v432
        %v448 = vunpack.c.l.b16 %v433
        %v449 = vunpack.c.l.b16 %v434
        %v450 = vunpack.c.l.b16 %v435
        %v451 = vpack.c.b16 %v448, %v447
        %v452 = vpack.c.b16 %v450, %v449
        %vm455 = vcmask 261120
        %v457 = vsel %vm455, %v431, 0
        %459 = vmatprep.subr.bf16.mxu0 0
        %460 = vmatpush1.bf16.msra.mxu0 0
        %461 = vmatprep.subr.bf16.mxu0 0
        %462 = vmatpush1.bf16.msra.mxu0 0
        %463 = vmatprep.subr.bf16.mxu0 0
        %464 = vmatpush1.bf16.msra.mxu0 0
        %465 = vmatprep.subr.bf16.mxu0 0
        %466 = vmatpush1.bf16.msra.mxu0 0
        %467 = vmatprep.subr.bf16.mxu0 0
        %468 = vmatpush1.bf16.msra.mxu0 0
        %469 = vmatprep.subr.bf16.mxu0 0
        %470 = vmatpush1.bf16.msra.mxu0 0
        %471 = vmatprep.subr.bf16.mxu0 0
        %472 = vmatpush1.bf16.msra.mxu0 %v452
        %473 = vmatprep.subr.bf16.mxu0 0
        %474 = vmatpush1.bf16.msra.mxu0 %v451
        %475 = vmatprep.subr.bf16.mxu0 0
        %476 = vmatpush2.bf16.msra.mxu0 0
        %477 = vmatprep.subr.bf16.mxu0 0
        %478 = vmatpush2.bf16.msra.mxu0 0
        %479 = vmatprep.subr.bf16.mxu0 0
        %480 = vmatpush2.bf16.msra.mxu0 0
        %481 = vmatprep.subr.bf16.mxu0 0
        %482 = vmatpush2.bf16.msra.mxu0 0
        %483 = vmatprep.subr.bf16.mxu0 0
        %484 = vmatpush2.bf16.msra.mxu0 0
        %485 = vmatprep.subr.bf16.mxu0 0
        %486 = vmatpush2.bf16.msra.mxu0 0
        %487 = vmatprep.subr.bf16.mxu0 0
        %488 = vmatpush2.bf16.msra.mxu0 0
        %489 = vmatprep.subr.bf16.mxu0 0
        %490 = vmatpush2.bf16.msra.mxu0 0
        %491 = vmatprep.mubr.bf16.mxu0 0
        %492 = vmatmul.mubr.bf16.gmra.mxu0 %v457
        %v493 = vpop.f32.mrf.mxu0
        %v494 = vadd.f32 %v441, %v493
        %v495 = vpop.f32.mrf.mxu0
        %v496 = vpop.f32.mrf.mxu0
        %v497 = vpop.f32.mrf.mxu0
        %498 = vdwg.mxu0
        %v499 = vxor.u32 %v494, 2147483648
        %v500 = vmul.f32 %v499, 1.442695
        %v501 = vpow.pop %v500
        %v502 = vadd.f32 %v501, 1.0
        %v503 = vrcp.pop %v502
        %v504 = vmul.f32 1.0, %v503
        %v505 = vld [vmem:[%s326] sm:$0xf]
        %v506 = vld [vmem:[#allocation2] sm:$0xf]
        %vm507 = vcmask 64512
        %v509 = vsel %vm507, %v505, 0
        %vm511 = vcmask 1043456
        %v513 = vsel %vm511, %v506, 0
        %515 = vmatprep.subr.bf16.mxu0 0
        %516 = vmatpush1.bf16.msra.mxu0 0
        %517 = vmatprep.subr.bf16.mxu0 0
        %518 = vmatpush1.bf16.msra.mxu0 0
        %519 = vmatprep.subr.bf16.mxu0 0
        %520 = vmatpush1.bf16.msra.mxu0 0
        %521 = vmatprep.subr.bf16.mxu0 0
        %522 = vmatpush1.bf16.msra.mxu0 0
        %523 = vmatprep.subr.bf16.mxu0 0
        %524 = vmatpush1.bf16.msra.mxu0 0
        %525 = vmatprep.subr.bf16.mxu0 0
        %526 = vmatpush1.bf16.msra.mxu0 0
        %527 = vmatprep.subr.bf16.mxu0 0
        %528 = vmatpush1.bf16.msra.mxu0 0
        %529 = vmatprep.subr.bf16.mxu0 0
        %530 = vmatpush1.bf16.msra.mxu0 %v513
        %531 = vmatprep.subr.bf16.mxu0 0
        %532 = vmatpush2.bf16.msra.mxu0 0
        %533 = vmatprep.subr.bf16.mxu0 0
        %534 = vmatpush2.bf16.msra.mxu0 0
        %535 = vmatprep.subr.bf16.mxu0 0
        %536 = vmatpush2.bf16.msra.mxu0 0
        %537 = vmatprep.subr.bf16.mxu0 0
        %538 = vmatpush2.bf16.msra.mxu0 0
        %539 = vmatprep.subr.bf16.mxu0 0
        %540 = vmatpush2.bf16.msra.mxu0 0
        %541 = vmatprep.subr.bf16.mxu0 0
        %542 = vmatpush2.bf16.msra.mxu0 0
        %543 = vmatprep.subr.bf16.mxu0 0
        %544 = vmatpush2.bf16.msra.mxu0 0
        %545 = vmatprep.subr.bf16.mxu0 0
        %546 = vmatpush2.bf16.msra.mxu0 0
        %547 = vmatprep.mubr.bf16.mxu0 0
        %548 = vmatmul.mubr.bf16.gmra.mxu0 %v509
        %v549 = vpop.f32.mrf.mxu0
        %v550 = vadd.f32 0.0, %v549
        %v551 = vpop.f32.mrf.mxu0
        %v552 = vpop.f32.mrf.mxu0
        %v553 = vpop.f32.mrf.mxu0
        %554 = vdwg.mxu0
        %v555 = vmul.f32 %v504, %v550
        %v556 = vrcp.pop %v550
        %558 = vrot.lane.b32.xlu0 %v556, 96
        %v559 = vpop.permute.xlu0 %558
        %v561 = vmul.f32 %v555, %v559
        %562 = vst.msk [vmem:[%s322] sm:$0xff] %vm455, %v561
        %s563 = sand.u32 %s182, 1
        %s564 = scalar_lea.sflag [#allocation5], %s563
        %s565 = sand.u32 %s182, 1
        %s566 = smul.addr %s565, 8
        %s567 = scalar_lea.vmem [#allocation9], %s566
        // Predicated region
        $region61: #{tpu_custom_call.1} parent=43 // pred_check
          %p568 = pneg %p192
        $region62: #{tpu_custom_call.1} parent=43 // pred_check_branch
          %570 = sbr.rel (%p568) target = $region64
        $region63: #{tpu_custom_call.1} parent=43 // pred_region
          %s572 = ssub.s32 128, 128
          %573 = vsyncadd %s564, %s572
          %s574 = sadd.s32 %s29, %s28
          %s575 = smul.addr %s574, 128
          %s576 = scalar_lea.hbm %s6, %s575
          %s578 = sshll.u32 %s567, 4
          %s579 = int_to_ptr.vmem [resolvable:$true] %s578
          %581 = dma.vmem_to_hbm [thread:$0]  %s579, 128, %s576, %s564
        $region64: #{tpu_custom_call.1} parent=43 // pred_fallthru
          _
      $region44: #{tpu_custom_call.1} parent=5 // pred_fallthru
        _
      %p582 = scmp.le.s32.totalorder 2, %s19
      // Predicated region
      $region65: #{tpu_custom_call.1} parent=5 // pred_check
        %p583 = pneg %p582
      $region66: #{tpu_custom_call.1} parent=5 // pred_check_branch
        %585 = sbr.rel (%p583) target = $region68
      $region67: #{tpu_custom_call.1} parent=5 // pred_region
        %s586 = ssub.s32 %s19, 2
        // Predicated region
        $region69: #{tpu_custom_call.1} parent=67 // pred_check
          %p587 = pneg %p198
        $region70: #{tpu_custom_call.1} parent=67 // pred_check_branch
          %589 = sbr.rel (%p587) target = $region72
        $region71: #{tpu_custom_call.1} parent=67 // pred_region
          %s590 = sand.u32 %s183, 1
          %s591 = scalar_lea.sflag [#allocation5], %s590
          %s592 = sand.u32 %s183, 1
          %s593 = smul.addr %s592, 8
          %s594 = scalar_lea.vmem [#allocation9], %s593
          %595 = dma.done %s591, 128
        $region72: #{tpu_custom_call.1} parent=67 // pred_fallthru
          _
      $region68: #{tpu_custom_call.1} parent=5 // pred_fallthru
        _
    $region6: #{tpu_custom_call.1} parent=1 // loop_footer
      %s23 = sadd.s32 1, %s19
    $region7: #{tpu_custom_call.1} parent=1 // loop_footer_branch
      %18 = sbr.rel target = $region3
    $region8: #{tpu_custom_call.1} parent=1 // loop_exit
      _
    %596 = vsyncpa [#allocation4], 1
    %s597 = scalar_lea.sflag [#allocation4], 1
    %598 = vsyncpa %s597, 1
    %599 = vsyncpa [#allocation7], 1
    %600 = vsyncpa [#allocation5], 1
    %s601 = scalar_lea.sflag [#allocation5], 1
    %602 = vsyncpa %s601, 1

</llo_original>
